<compile_context>
chip_gen: v7x
topology: tpu7x:2x2x1
jax: 0.10.0
libtpu: 0.0.40
codegen_flags: <defaults>
</compile_context>

<pallas_src>
import math

import jax
import jax.numpy as jnp
from jax.experimental import pallas as pl
from jax.experimental.pallas import tpu as pltpu


_TM = 256      # output row tile (MXU-friendly, (8,128)-aligned)
_LANE = 128    # pad feature dims to a multiple of the lane width


def _round_up(x, m):
    return ((x + m - 1) // m) * m


_VMEM_LIMIT_CACHE = None


def _vmem_limit_bytes():
    """Scoped-VMEM budget: ~3/4 of physical VMEM, capped at 96 MiB.

    v5e/v6e (128 MiB physical) -> 96 MiB; v7x (64 MiB) -> 48 MiB.  Falls back
    to 48 MiB (safe on every generation) if the hardware query fails.
    """
    global _VMEM_LIMIT_CACHE
    if _VMEM_LIMIT_CACHE is None:
        cap = 64 * 1024 * 1024
        try:
            info_cap = int(pltpu.get_tpu_info().vmem_capacity_bytes)
            if info_cap > 0:
                cap = info_cap
        except Exception:
            pass
        _VMEM_LIMIT_CACHE = min(cap * 3 // 4, 96 * 1024 * 1024)
    return _VMEM_LIMIT_CACHE


# ----------------------------- Pallas kernels -----------------------------

def _linear_relu_kernel(x_ref, w_ref, b_ref, o_ref):
    # out = relu(x @ W + b); f32 compute, store in o_ref.dtype (bf16).
    x = x_ref[...].astype(jnp.float32)
    y = jnp.dot(x, w_ref[...], preferred_element_type=jnp.float32)
    o_ref[...] = jnp.maximum(y + b_ref[...], 0.0).astype(o_ref.dtype)


def _linear_sigmoid_kernel(x_ref, w_ref, b_ref, o_ref):
    # out = sigmoid(x @ W + b); f32 compute/output.
    x = x_ref[...].astype(jnp.float32)
    y = jnp.dot(x, w_ref[...], preferred_element_type=jnp.float32)
    o_ref[...] = jax.nn.sigmoid(y + b_ref[...]).astype(o_ref.dtype)


def _gcnii_layer_kernel(scal_ref, adj_ref, xk_ref, h0_ref, xi_ref, w_ref,
                        o_ref, acc_ref):
    # GraphConvolution (variant=False, residual=True) fused with ReLU:
    #   hi      = adj @ x                       (bf16 x bf16, f32 accumulate)
    #   support = (1 - alpha) * hi + alpha * h0
    #   out     = relu(theta * (support @ W) + (1 - theta) * support + x)
    k = pl.program_id(1)

    @pl.when(k == 0)
    def _():
        acc_ref[...] = jnp.zeros_like(acc_ref)

    # adj and the streamed x block are both bf16 -> native MXU matmul, no
    # per-step VPU cast.
    acc_ref[...] += jnp.dot(adj_ref[...], xk_ref[...],
                            preferred_element_type=jnp.float32)

    @pl.when(k == pl.num_programs(1) - 1)
    def _():
        theta = scal_ref[0]
        one_m_theta = scal_ref[1]
        alpha = scal_ref[2]
        one_m_alpha = scal_ref[3]
        support = (one_m_alpha * acc_ref[...]
                   + alpha * h0_ref[...].astype(jnp.float32))
        # Epilogue matmul in bf16 (native MXU rate on v6e/v7x), f32 accumulate.
        out = theta * jnp.dot(support.astype(jnp.bfloat16), w_ref[...],
                              preferred_element_type=jnp.float32)
        out = out + one_m_theta * support + xi_ref[...].astype(jnp.float32)
        o_ref[...] = jnp.maximum(out, 0.0).astype(o_ref.dtype)


# ----------------------------- wrappers -----------------------------

def _row_tiled_linear(kernel, x, w, b, out_dtype, *, tm, transcendental=False):
    n, f = x.shape
    h = w.shape[1]
    cost = pl.CostEstimate(
        flops=int(2 * n * f * h),
        transcendentals=int(n * h if transcendental else 0),
        bytes_accessed=int(x.dtype.itemsize * n * f + 4 * (f * h + h)
                           + jnp.dtype(out_dtype).itemsize * n * h),
    )
    return pl.pallas_call(
        kernel,
        out_shape=jax.ShapeDtypeStruct((n, h), out_dtype),
        grid_spec=pltpu.PrefetchScalarGridSpec(
            num_scalar_prefetch=0,
            grid=(n // tm,),
            in_specs=[
                pl.BlockSpec((tm, f), lambda i: (i, 0)),   # row tile of x
                pl.BlockSpec((f, h), lambda i: (0, 0)),    # resident W
                pl.BlockSpec((1, h), lambda i: (0, 0)),    # resident bias
            ],
            out_specs=pl.BlockSpec((tm, h), lambda i: (i, 0)),
        ),
        compiler_params=pltpu.CompilerParams(
            dimension_semantics=("parallel",),
            vmem_limit_bytes=_vmem_limit_bytes()),
        cost_estimate=cost,
    )(x, w, b)


def linear_relu(x, w, b, *, tm=_TM):
    # bf16 output: feeds the bf16 GCNII layers (halves activation HBM traffic).
    return _row_tiled_linear(_linear_relu_kernel, x, w, b, jnp.bfloat16, tm=tm)


def linear_sigmoid(x, w, b, *, tm=_TM):
    return _row_tiled_linear(_linear_sigmoid_kernel, x, w, b, jnp.float32,
                             tm=tm, transcendental=True)


def gcnii_layer(adj_bf16, x, h0, w_bf16, theta, alpha, *, tm=_TM, tk=_TM):
    n, h = x.shape
    # hoisted scalars: theta, 1-theta, alpha, 1-alpha (SMEM) so one compiled
    # kernel is reused for every layer.
    scal = jnp.array([theta, 1.0 - theta, alpha, 1.0 - alpha], jnp.float32)
    cost = pl.CostEstimate(
        flops=int(2 * n * n * h + 2 * n * h * h),
        transcendentals=0,
        bytes_accessed=int(2 * (n * n + n * h * (n // tk) + 3 * n * h + h * h)),
    )
    return pl.pallas_call(
        _gcnii_layer_kernel,
        out_shape=jax.ShapeDtypeStruct((n, h), jnp.bfloat16),
        grid_spec=pltpu.PrefetchScalarGridSpec(
            num_scalar_prefetch=0,
            grid=(n // tm, n // tk),
            in_specs=[
                pl.BlockSpec(memory_space=pltpu.MemorySpace.SMEM),  # scalars
                pl.BlockSpec((tm, tk), lambda i, k: (i, k)),        # adj tile
                # Contraction stream of x.  When tk == n the block index is
                # constant, so x is VMEM-resident and DMA'd once per layer
                # (also avoids the 2x re-read across the two v7x TensorCores).
                pl.BlockSpec((tk, h), lambda i, k: (k, 0)),
                pl.BlockSpec((tm, h), lambda i, k: (i, 0)),         # h0 rows
                pl.BlockSpec((tm, h), lambda i, k: (i, 0)),         # residual rows
                pl.BlockSpec((h, h), lambda i, k: (0, 0)),          # bf16 weight
            ],
            out_specs=pl.BlockSpec((tm, h), lambda i, k: (i, 0)),
            scratch_shapes=[pltpu.VMEM((tm, h), jnp.float32)],      # f32 accumulator
        ),
        compiler_params=pltpu.CompilerParams(
            dimension_semantics=("parallel", "arbitrary"),
            vmem_limit_bytes=_vmem_limit_bytes()),
        cost_estimate=cost,
    )(scal, adj_bf16, x, h0, x, w_bf16)


def _pick_tiles(n, h_pad, *, tm=_TM):
    """Pick (n_pad, tk): prefer tk == n_pad (whole x VMEM-resident, one fat
    MXU step per row tile); otherwise fall back to a large streaming tile."""
    budget = _vmem_limit_bytes() * 3 // 4

    def fits(tk):
        adj = 2 * tm * tk * 2                 # double-buffered bf16 adj tile
        xk = 2 * tk * h_pad * 2               # double-buffered bf16 x block
        small = (2 * 2 * tm * h_pad * 2       # h0 + residual row tiles (2 bufs)
                 + 2 * h_pad * h_pad * 2      # bf16 layer weight (2 bufs)
                 + tm * h_pad * 4             # f32 accumulator scratch
                 + 2 * tm * h_pad * 2)        # bf16 output tile (2 bufs)
        return adj + xk + small <= budget

    n_pad = _round_up(n, tm)
    if fits(n_pad):
        return n_pad, n_pad
    for tk in (2048, 1024, 512, 256):         # all multiples of tm=256
        if fits(tk):
            return _round_up(n, tk), tk
    return _round_up(n, tm), tm


# ----------------------------- glue (plain JAX) -----------------------------

def build_norm_adj(edge_index, num_nodes, edge_weight=None):
    """normg(): add self-loops + symmetric normalization, densified to (N, N).

    Assumes the input graph has no pre-existing self-loops, so
    `add_remaining_self_loops` reduces to appending (i, i) with weight 1.
    """
    if edge_weight is None:
        edge_weight = jnp.ones((edge_index.shape[1],), jnp.float32)
    loop = jnp.arange(num_nodes)
    row = jnp.concatenate([edge_index[0], loop])
    col = jnp.concatenate([edge_index[1], loop])
    w = jnp.concatenate([edge_weight, jnp.ones((num_nodes,), jnp.float32)])
    deg = jnp.zeros((num_nodes,), jnp.float32).at[row].add(w)
    deg_inv_sqrt = jnp.where(deg > 0, jax.lax.rsqrt(deg), 0.0)
    norm_w = deg_inv_sqrt[row] * w * deg_inv_sqrt[col]
    adj = jnp.zeros((num_nodes, num_nodes), jnp.float32).at[row, col].add(norm_w)
    return adj


def init_params(key, nfeat, nlayers, nhidden, nclass):
    ks = jax.random.split(key, 2 * nlayers + 4)
    params = {}
    bound0 = 1.0 / math.sqrt(nfeat)
    params["fc0_w"] = jax.random.uniform(ks[0], (nfeat, nhidden), jnp.float32,
                                         -bound0, bound0)
    params["fc0_b"] = jax.random.uniform(ks[1], (nhidden,), jnp.float32,
                                         -bound0, bound0)
    stdv = 1.0 / math.sqrt(nhidden)
    params["conv_w"] = [
        jax.random.uniform(ks[2 + i], (nhidden, nhidden), jnp.float32, -stdv, stdv)
        for i in range(nlayers)
    ]
    bound1 = 1.0 / math.sqrt(nhidden)
    params["fc1_w"] = jax.random.uniform(ks[2 + nlayers], (nhidden, nclass),
                                         jnp.float32, -bound1, bound1)
    params["fc1_b"] = jax.random.uniform(ks[3 + nlayers], (nclass,), jnp.float32,
                                         -bound1, bound1)
    return params


def gcnii_ppi_forward(x, edge_index, params, *, nlayers, lamda, alpha,
                      edge_weight=None, tm=_TM):
    n, nfeat = x.shape
    nhidden = params["fc0_w"].shape[1]
    nclass = params["fc1_w"].shape[1]

    f_pad = _round_up(nfeat, _LANE)
    h_pad = _round_up(nhidden, _LANE)
    c_pad = _round_up(nclass, _LANE)
    n_pad, tk = _pick_tiles(n, h_pad, tm=tm)

    # normalized dense adjacency, zero-padded, stored bf16 (dominant HBM stream)
    adj = build_norm_adj(edge_index, n, edge_weight)
    adj = jnp.pad(adj, ((0, n_pad - n), (0, n_pad - n))).astype(jnp.bfloat16)

    # Zero-padded, lane-dense parameters.  Invariant (load-bearing): padded
    # COLUMNS of every activation stay exactly zero (weight/bias pads are
    # zero); padded ROWS of h become relu(bias) != 0 after fc0 but can never
    # contaminate real rows because adj's padded columns are zero and the
    # final result is sliced back to [:n, :nclass].
    xp = jnp.pad(x, ((0, n_pad - n), (0, f_pad - nfeat)))
    fc0_w = jnp.pad(params["fc0_w"], ((0, f_pad - nfeat), (0, h_pad - nhidden)))
    fc0_b = jnp.pad(params["fc0_b"], (0, h_pad - nhidden)).reshape(1, h_pad)
    fc1_w = jnp.pad(params["fc1_w"], ((0, h_pad - nhidden), (0, c_pad - nclass)))
    fc1_b = jnp.pad(params["fc1_b"], (0, c_pad - nclass)).reshape(1, c_pad)
    conv_w = [jnp.pad(w, ((0, h_pad - nhidden), (0, h_pad - nhidden)))
              .astype(jnp.bfloat16)
              for w in params["conv_w"]]

    # dropout (inference mode) -> identity
    h = linear_relu(xp, fc0_w, fc0_b, tm=tm)                 # bf16 activations
    h0 = h
    for i in range(nlayers):
        theta = math.log(lamda / (i + 1) + 1.0)
        h = gcnii_layer(adj, h, h0, conv_w[i], theta, alpha, tm=tm, tk=tk)
    out = linear_sigmoid(h, fc1_w, fc1_b, tm=tm)             # f32 output
    return out[:n, :nclass]


def _reference_forward(x, edge_index, params, *, nlayers, lamda, alpha,
                       edge_weight=None):
    # pure-JAX f32 reference for sanity checking the Pallas path
    n = x.shape[0]
    adj = build_norm_adj(edge_index, n, edge_weight)
    h = jnp.maximum(x @ params["fc0_w"] + params["fc0_b"], 0.0)
    h0 = h
    for i in range(nlayers):
        theta = math.log(lamda / (i + 1) + 1.0)
        hi = adj @ h
        support = (1.0 - alpha) * hi + alpha * h0
        out = theta * (support @ params["conv_w"][i]) + (1.0 - theta) * support + h
        h = jnp.maximum(out, 0.0)
    return jax.nn.sigmoid(h @ params["fc1_w"] + params["fc1_b"])


# ----------------------------- demo -----------------------------

if __name__ == "__main__":
    N, nfeat, nhidden, nclass, nlayers = 64, 32, 32, 8, 4
    lamda, alpha = 0.5, 0.1   # variant=False, residual=True, eval-mode dropout

    key = jax.random.PRNGKey(0)
    k_x, k_p = jax.random.split(key)

    x = jax.random.normal(k_x, (N, nfeat), jnp.float32)

    # undirected ring graph, no self loops (normg adds them)
    src = jnp.arange(N, dtype=jnp.int32)
    dst = (src + 1) % N
    edge_index = jnp.stack(
        [jnp.concatenate([src, dst]), jnp.concatenate([dst, src])], axis=0)

    params = init_params(k_p, nfeat, nlayers, nhidden, nclass)

    out = gcnii_ppi_forward(x, edge_index, params,
                            nlayers=nlayers, lamda=lamda, alpha=alpha)
    out = jax.block_until_ready(out)

    ref = _reference_forward(x, edge_index, params,
                             nlayers=nlayers, lamda=lamda, alpha=alpha)

    assert out.shape == (N, nclass)
    assert bool(jnp.all(jnp.isfinite(out)))
    assert bool(jnp.all((out >= 0.0) & (out <= 1.0)))        # sigmoid range
    # bf16 adjacency/activations/weights with f32 accumulation: loose
    # tolerance vs the f32 reference.
    assert bool(jnp.allclose(out, ref, atol=6e-2, rtol=6e-2)), \
        float(jnp.max(jnp.abs(out - ref)))
    print("KERNEL_OK")
</pallas_src>

<mosaic_0001>
module attributes {stable_mosaic.version = 11 : i64} {
  func.func @_linear_relu_kernel(%arg0: i32, %arg1: memref<256x128xf32, #tpu.memory_space<vmem>>, %arg2: memref<128x128xf32, #tpu.memory_space<vmem>>, %arg3: memref<1x128xf32, #tpu.memory_space<vmem>>, %arg4: memref<256x128xbf16, #tpu.memory_space<vmem>>) attributes {dimension_semantics = [#tpu.dimension_semantics<parallel>], iteration_bounds = array<i64: 1>, scalar_prefetch = 0 : i64, scratch_operands = 0 : i64, tpu.core_type = #tpu.core_type<tc>, window_params = [{transform_indices = @transform_0, window_bounds = array<i64: 256, 128>}, {pipeline_mode = #tpu.pipeline_mode<synchronous>, transform_indices = @transform_1, window_bounds = array<i64: 128, 128>}, {pipeline_mode = #tpu.pipeline_mode<synchronous>, transform_indices = @transform_2, window_bounds = array<i64: 1, 128>}, {transform_indices = @transform_3, window_bounds = array<i64: 256, 128>}]} {
    %c0 = arith.constant 0 : index
    %c0_0 = arith.constant 0 : index
    %0 = vector.load %arg1[%c0, %c0_0] : memref<256x128xf32, #tpu.memory_space<vmem>>, vector<256x128xf32>
    %c0_1 = arith.constant 0 : index
    %c0_2 = arith.constant 0 : index
    %1 = vector.load %arg2[%c0_1, %c0_2] : memref<128x128xf32, #tpu.memory_space<vmem>>, vector<128x128xf32>
    %cst = arith.constant dense<0.000000e+00> : vector<256x128xf32>
    %2 = tpu.matmul %0, %1, %cst {dimension_numbers = #tpu.dot_dimension_numbers<[1], [0], [0], [1], [0, 0, 1, 1], [], []>} : vector<256x128xf32>, vector<128x128xf32>, vector<256x128xf32> -> vector<256x128xf32>
    %c0_3 = arith.constant 0 : index
    %c0_4 = arith.constant 0 : index
    %3 = vector.load %arg3[%c0_3, %c0_4] : memref<1x128xf32, #tpu.memory_space<vmem>>, vector<1x128xf32>
    %4 = vector.broadcast %3 : vector<1x128xf32> to vector<256x128xf32>
    %5 = arith.addf %2, %4 : vector<256x128xf32>
    %cst_5 = arith.constant 0.000000e+00 : f32
    %6 = vector.broadcast %cst_5 : f32 to vector<256x128xf32>
    %7 = arith.maximumf %5, %6 : vector<256x128xf32>
    %8 = arith.truncf %7 : vector<256x128xf32> to vector<256x128xbf16>
    %c0_6 = arith.constant 0 : index
    %c0_7 = arith.constant 0 : index
    %9 = vector.load %arg4[%c0_6, %c0_7] : memref<256x128xbf16, #tpu.memory_space<vmem>>, vector<256x128xbf16>
    tpu.vector_store %arg4[%c0_6, %c0_7], %8 {strides = array<i32>} : memref<256x128xbf16, #tpu.memory_space<vmem>>, vector<256x128xbf16>,
    return
  }
  func.func @transform_0(%arg0: i32) -> (i32, i32) {
    %c0_i32 = arith.constant 0 : i32
    %c0_i32_0 = arith.constant 0 : i32
    return %arg0, %c0_i32 : i32, i32
  }
  func.func @transform_1(%arg0: i32) -> (i32, i32) {
    %c0_i32 = arith.constant 0 : i32
    %c0_i32_0 = arith.constant 0 : i32
    %c0_i32_1 = arith.constant 0 : i32
    return %c0_i32, %c0_i32_0 : i32, i32
  }
  func.func @transform_2(%arg0: i32) -> (i32, i32) {
    %c0_i32 = arith.constant 0 : i32
    %c0_i32_0 = arith.constant 0 : i32
    %c0_i32_1 = arith.constant 0 : i32
    return %c0_i32, %c0_i32_0 : i32, i32
  }
  func.func @transform_3(%arg0: i32) -> (i32, i32) {
    %c0_i32 = arith.constant 0 : i32
    %c0_i32_0 = arith.constant 0 : i32
    return %arg0, %c0_i32 : i32, i32
  }
}

</mosaic_0001>

<llo_original>
// kernel: tpu_custom_call.1
$region0: #{tpu_custom_call.1}
  #allocation0 [shape = 'u32[]', space=smem, size = 0x4, offset = 0x4, fixed_abs, tag = 'smem constant byte address 0x4 - core index']
  #allocation1 [shape = 'u32[144,128]{1,0:T(1,128)}', space=vmem, size = 0x12000, scoped, tag = 'internal scratch']
  %s0 = inlined_call_operand.hbm [shape: f32[256,128], index: 0, kind: input, shape index: {}]
  %s1 = inlined_call_operand.hbm [shape: f32[128,128], index: 1, kind: input, shape index: {}]
  %s2 = inlined_call_operand.vmem [shape: f32[1,128], index: 2, kind: input, shape index: {}]
  %s3 = inlined_call_operand.hbm [shape: bf16[256,128], index: 3, kind: output, shape index: {}]
  %s4 = sld [smem:[#allocation0]]
  $region30: #{tpu_custom_call.1} parent=0
    _
  %s6 = ssub.s32 1, %s4
  %s7 = scalar_select 0, %s6, %s4
  $region1: #{tpu_custom_call.1} parent=0
    #allocation2 [shape = 'u8[131072]{0}', space=vmem, size = 0x20000, scoped, tag = 'input window, operand 0, single buffered']
    #allocation3 [shape = 's32[1]{0}', space=sflag, size = 0x4, scoped, tag = 'scoped memory for tpu_custom_call.1']
    #allocation4 [shape = 's32[1]{0}', space=sflag, size = 0x4, scoped, tag = 'scoped memory for tpu_custom_call.1']
    #allocation5 [shape = 'u8[65536]{0}', space=vmem, size = 0x10000, scoped, tag = 'input window, operand 1, single buffered']
    #allocation6 [shape = 's32[1]{0}', space=sflag, size = 0x4, scoped, tag = 'scoped memory for tpu_custom_call.1']
    #allocation7 [shape = 'u8[65536]{0}', space=vmem, size = 0x10000, scoped, tag = 'output window, operand 0, single buffered']
    %8 = vsyncpa [#allocation3], 0
    %9 = vsyncpa [#allocation6], 0
    %10 = vsyncpa [#allocation4], 0
    // Predicated region
    $region2: #{tpu_custom_call.1} parent=1 // pred_check
      _
    $region3: #{tpu_custom_call.1} parent=1 // pred_check_branch
      %12 = sbr.rel (0) target = $region5
    $region4: #{tpu_custom_call.1} parent=1 // pred_region
      %s14 = ssub.s32 4096, 4096
      %15 = vsyncadd [#allocation3], %s14
      %s16 = sshll.u32 [#allocation2], 4
      %s17 = int_to_ptr.vmem [resolvable:$true] %s16
      %22 = dma.hbm_to_vmem [thread:$0]  %s0, 4096, %s17, [#allocation3], 128, 128, 8
    $region5: #{tpu_custom_call.1} parent=1 // pred_fallthru
      _
    // Predicated region
    $region6: #{tpu_custom_call.1} parent=1 // pred_check
      _
    $region7: #{tpu_custom_call.1} parent=1 // pred_check_branch
      %24 = sbr.rel (0) target = $region9
    $region8: #{tpu_custom_call.1} parent=1 // pred_region
      %s26 = ssub.s32 2048, 2048
      %27 = vsyncadd [#allocation6], %s26
      %s28 = sshll.u32 [#allocation5], 4
      %s29 = int_to_ptr.vmem [resolvable:$true] %s28
      %34 = dma.hbm_to_vmem [thread:$0]  %s1, 2048, %s29, [#allocation6], 128, 128, 8
    $region9: #{tpu_custom_call.1} parent=1 // pred_fallthru
      _
    // Predicated region
    $region10: #{tpu_custom_call.1} parent=1 // pred_check
      _
    $region11: #{tpu_custom_call.1} parent=1 // pred_check_branch
      %36 = sbr.rel (0) target = $region13
    $region12: #{tpu_custom_call.1} parent=1 // pred_region
      _
    $region13: #{tpu_custom_call.1} parent=1 // pred_fallthru
      _
    // Predicated region
    $region14: #{tpu_custom_call.1} parent=1 // pred_check
      _
    $region15: #{tpu_custom_call.1} parent=1 // pred_check_branch
      %38 = sbr.rel (0) target = $region17
    $region16: #{tpu_custom_call.1} parent=1 // pred_region
      %39 = dma.done [#allocation3], 4096
    $region17: #{tpu_custom_call.1} parent=1 // pred_fallthru
      _
    // Predicated region
    $region18: #{tpu_custom_call.1} parent=1 // pred_check
      _
    $region19: #{tpu_custom_call.1} parent=1 // pred_check_branch
      %41 = sbr.rel (0) target = $region21
    $region20: #{tpu_custom_call.1} parent=1 // pred_region
      %42 = dma.done [#allocation6], 2048
    $region21: #{tpu_custom_call.1} parent=1 // pred_fallthru
      _
    %v43 = vld [vmem:[#allocation2] sm:$0xff]
    %v44 = vld [vmem:[#allocation2 + $0x8] sm:$0xff]
    %v45 = vld [vmem:[#allocation2 + $0x10] sm:$0xff]
    %v46 = vld [vmem:[#allocation2 + $0x18] sm:$0xff]
    %v47 = vld [vmem:[#allocation2 + $0x20] sm:$0xff]
    %v48 = vld [vmem:[#allocation2 + $0x28] sm:$0xff]
    %v49 = vld [vmem:[#allocation2 + $0x30] sm:$0xff]
    %v50 = vld [vmem:[#allocation2 + $0x38] sm:$0xff]
    %v51 = vld [vmem:[#allocation2 + $0x40] sm:$0xff]
    %v52 = vld [vmem:[#allocation2 + $0x48] sm:$0xff]
    %v53 = vld [vmem:[#allocation2 + $0x50] sm:$0xff]
    %v54 = vld [vmem:[#allocation2 + $0x58] sm:$0xff]
    %v55 = vld [vmem:[#allocation2 + $0x60] sm:$0xff]
    %v56 = vld [vmem:[#allocation2 + $0x68] sm:$0xff]
    %v57 = vld [vmem:[#allocation2 + $0x70] sm:$0xff]
    %v58 = vld [vmem:[#allocation2 + $0x78] sm:$0xff]
    %v59 = vld [vmem:[#allocation2 + $0x80] sm:$0xff]
    %v60 = vld [vmem:[#allocation2 + $0x88] sm:$0xff]
    %v61 = vld [vmem:[#allocation2 + $0x90] sm:$0xff]
    %v62 = vld [vmem:[#allocation2 + $0x98] sm:$0xff]
    %v63 = vld [vmem:[#allocation2 + $0xa0] sm:$0xff]
    %v64 = vld [vmem:[#allocation2 + $0xa8] sm:$0xff]
    %v65 = vld [vmem:[#allocation2 + $0xb0] sm:$0xff]
    %v66 = vld [vmem:[#allocation2 + $0xb8] sm:$0xff]
    %v67 = vld [vmem:[#allocation2 + $0xc0] sm:$0xff]
    %v68 = vld [vmem:[#allocation2 + $0xc8] sm:$0xff]
    %v69 = vld [vmem:[#allocation2 + $0xd0] sm:$0xff]
    %v70 = vld [vmem:[#allocation2 + $0xd8] sm:$0xff]
    %v71 = vld [vmem:[#allocation2 + $0xe0] sm:$0xff]
    %v72 = vld [vmem:[#allocation2 + $0xe8] sm:$0xff]
    %v73 = vld [vmem:[#allocation2 + $0xf0] sm:$0xff]
    %v74 = vld [vmem:[#allocation2 + $0xf8] sm:$0xff]
    %v75 = vld [vmem:[#allocation5] sm:$0xff]
    %v76 = vld [vmem:[#allocation5 + $0x8] sm:$0xff]
    %v77 = vld [vmem:[#allocation5 + $0x10] sm:$0xff]
    %v78 = vld [vmem:[#allocation5 + $0x18] sm:$0xff]
    %v79 = vld [vmem:[#allocation5 + $0x20] sm:$0xff]
    %v80 = vld [vmem:[#allocation5 + $0x28] sm:$0xff]
    %v81 = vld [vmem:[#allocation5 + $0x30] sm:$0xff]
    %v82 = vld [vmem:[#allocation5 + $0x38] sm:$0xff]
    %v83 = vld [vmem:[#allocation5 + $0x40] sm:$0xff]
    %v84 = vld [vmem:[#allocation5 + $0x48] sm:$0xff]
    %v85 = vld [vmem:[#allocation5 + $0x50] sm:$0xff]
    %v86 = vld [vmem:[#allocation5 + $0x58] sm:$0xff]
    %v87 = vld [vmem:[#allocation5 + $0x60] sm:$0xff]
    %v88 = vld [vmem:[#allocation5 + $0x68] sm:$0xff]
    %v89 = vld [vmem:[#allocation5 + $0x70] sm:$0xff]
    %v90 = vld [vmem:[#allocation5 + $0x78] sm:$0xff]
    %v91 = vld [vmem:[%s2] sm:$0x1]
    %v93 = vlaneseq
    %v94 = vshrl.u32 %v93, 7
    %v95 = vsub.s32 0, %v94
    %v96 = vrot.slane %v91, %v95
    %98 = vmatprep.subr.mxu0 0.0
    %99 = vmatpush1.msra.mxu0 %v75
    %100 = vmatprep.subr.mxu0 0.0
    %101 = vmatpush1.msra.mxu0 %v76
    %102 = vmatprep.subr.mxu0 0.0
    %103 = vmatpush1.msra.mxu0 %v77
    %104 = vmatprep.subr.mxu0 0.0
    %105 = vmatpush1.msra.mxu0 %v78
    %106 = vmatprep.subr.mxu0 0.0
    %107 = vmatpush1.msra.mxu0 %v79
    %108 = vmatprep.subr.mxu0 0.0
    %109 = vmatpush1.msra.mxu0 %v80
    %110 = vmatprep.subr.mxu0 0.0
    %111 = vmatpush1.msra.mxu0 %v81
    %112 = vmatprep.subr.mxu0 0.0
    %113 = vmatpush1.msra.mxu0 %v82
    %114 = vmatprep.subr.mxu0 0.0
    %115 = vmatpush1.msra.mxu0 %v83
    %116 = vmatprep.subr.mxu0 0.0
    %117 = vmatpush1.msra.mxu0 %v84
    %118 = vmatprep.subr.mxu0 0.0
    %119 = vmatpush1.msra.mxu0 %v85
    %120 = vmatprep.subr.mxu0 0.0
    %121 = vmatpush1.msra.mxu0 %v86
    %122 = vmatprep.subr.mxu0 0.0
    %123 = vmatpush1.msra.mxu0 %v87
    %124 = vmatprep.subr.mxu0 0.0
    %125 = vmatpush1.msra.mxu0 %v88
    %126 = vmatprep.subr.mxu0 0.0
    %127 = vmatpush1.msra.mxu0 %v89
    %128 = vmatprep.subr.mxu0 0.0
    %129 = vmatpush1.msra.mxu0 %v90
    %130 = vmatprep.subr.mxu0 0.0
    %131 = vmatpush1.msra.mxu0 0.0
    %132 = vmatprep.subr.mxu0 0.0
    %133 = vmatpush1.msra.mxu0 0.0
    %134 = vmatprep.subr.mxu0 0.0
    %135 = vmatpush1.msra.mxu0 0.0
    %136 = vmatprep.subr.mxu0 0.0
    %137 = vmatpush1.msra.mxu0 0.0
    %138 = vmatprep.subr.mxu0 0.0
    %139 = vmatpush1.msra.mxu0 0.0
    %140 = vmatprep.subr.mxu0 0.0
    %141 = vmatpush1.msra.mxu0 0.0
    %142 = vmatprep.subr.mxu0 0.0
    %143 = vmatpush1.msra.mxu0 0.0
    %144 = vmatprep.subr.mxu0 0.0
    %145 = vmatpush1.msra.mxu0 0.0
    %146 = vmatprep.subr.mxu0 0.0
    %147 = vmatpush1.msra.mxu0 0.0
    %148 = vmatprep.subr.mxu0 0.0
    %149 = vmatpush1.msra.mxu0 0.0
    %150 = vmatprep.subr.mxu0 0.0
    %151 = vmatpush1.msra.mxu0 0.0
    %152 = vmatprep.subr.mxu0 0.0
    %153 = vmatpush1.msra.mxu0 0.0
    %154 = vmatprep.subr.mxu0 0.0
    %155 = vmatpush1.msra.mxu0 0.0
    %156 = vmatprep.subr.mxu0 0.0
    %157 = vmatpush1.msra.mxu0 0.0
    %158 = vmatprep.subr.mxu0 0.0
    %159 = vmatpush1.msra.mxu0 0.0
    %160 = vmatprep.subr.mxu0 0.0
    %161 = vmatpush1.msra.mxu0 0.0
    %162 = vmatprep.mubr.f32.mxu0 0.0
    %163 = vmatmul.mubr.f32.gmra.mrb[0].mxu0 %v43
    %v164 = vpop.f32.mrb[0].mxu0
    %v165 = vadd.f32 %v96, %v164
    %v166 = vpop.f32.mrb[0].mxu0
    %167 = vmatprep.mubr.f32.mxu0 0.0
    %168 = vmatmul.mubr.f32.gmra.mrb[0].mxu0 %v44
    %v169 = vpop.f32.mrb[0].mxu0
    %v170 = vadd.f32 %v96, %v169
    %v171 = vpop.f32.mrb[0].mxu0
    %172 = vmatprep.mubr.f32.mxu0 0.0
    %173 = vmatmul.mubr.f32.gmra.mrb[0].mxu0 %v45
    %v174 = vpop.f32.mrb[0].mxu0
    %v175 = vadd.f32 %v96, %v174
    %v176 = vpop.f32.mrb[0].mxu0
    %177 = vmatprep.mubr.f32.mxu0 0.0
    %178 = vmatmul.mubr.f32.gmra.mrb[0].mxu0 %v46
    %v179 = vpop.f32.mrb[0].mxu0
    %v180 = vadd.f32 %v96, %v179
    %v181 = vpop.f32.mrb[0].mxu0
    %182 = vmatprep.mubr.f32.mxu0 0.0
    %183 = vmatmul.mubr.f32.gmra.mrb[0].mxu0 %v47
    %v184 = vpop.f32.mrb[0].mxu0
    %v185 = vadd.f32 %v96, %v184
    %v186 = vpop.f32.mrb[0].mxu0
    %187 = vmatprep.mubr.f32.mxu0 0.0
    %188 = vmatmul.mubr.f32.gmra.mrb[0].mxu0 %v48
    %v189 = vpop.f32.mrb[0].mxu0
    %v190 = vadd.f32 %v96, %v189
    %v191 = vpop.f32.mrb[0].mxu0
    %192 = vmatprep.mubr.f32.mxu0 0.0
    %193 = vmatmul.mubr.f32.gmra.mrb[0].mxu0 %v49
    %v194 = vpop.f32.mrb[0].mxu0
    %v195 = vadd.f32 %v96, %v194
    %v196 = vpop.f32.mrb[0].mxu0
    %197 = vmatprep.mubr.f32.mxu0 0.0
    %198 = vmatmul.mubr.f32.gmra.mrb[0].mxu0 %v50
    %v199 = vpop.f32.mrb[0].mxu0
    %v200 = vadd.f32 %v96, %v199
    %v201 = vpop.f32.mrb[0].mxu0
    %202 = vmatprep.mubr.f32.mxu0 0.0
    %203 = vmatmul.mubr.f32.gmra.mrb[0].mxu0 %v51
    %v204 = vpop.f32.mrb[0].mxu0
    %v205 = vadd.f32 %v96, %v204
    %v206 = vpop.f32.mrb[0].mxu0
    %207 = vmatprep.mubr.f32.mxu0 0.0
    %208 = vmatmul.mubr.f32.gmra.mrb[0].mxu0 %v52
    %v209 = vpop.f32.mrb[0].mxu0
    %v210 = vadd.f32 %v96, %v209
    %v211 = vpop.f32.mrb[0].mxu0
    %212 = vmatprep.mubr.f32.mxu0 0.0
    %213 = vmatmul.mubr.f32.gmra.mrb[0].mxu0 %v53
    %v214 = vpop.f32.mrb[0].mxu0
    %v215 = vadd.f32 %v96, %v214
    %v216 = vpop.f32.mrb[0].mxu0
    %217 = vmatprep.mubr.f32.mxu0 0.0
    %218 = vmatmul.mubr.f32.gmra.mrb[0].mxu0 %v54
    %v219 = vpop.f32.mrb[0].mxu0
    %v220 = vadd.f32 %v96, %v219
    %v221 = vpop.f32.mrb[0].mxu0
    %222 = vmatprep.mubr.f32.mxu0 0.0
    %223 = vmatmul.mubr.f32.gmra.mrb[0].mxu0 %v55
    %v224 = vpop.f32.mrb[0].mxu0
    %v225 = vadd.f32 %v96, %v224
    %v226 = vpop.f32.mrb[0].mxu0
    %227 = vmatprep.mubr.f32.mxu0 0.0
    %228 = vmatmul.mubr.f32.gmra.mrb[0].mxu0 %v56
    %v229 = vpop.f32.mrb[0].mxu0
    %v230 = vadd.f32 %v96, %v229
    %v231 = vpop.f32.mrb[0].mxu0
    %232 = vmatprep.mubr.f32.mxu0 0.0
    %233 = vmatmul.mubr.f32.gmra.mrb[0].mxu0 %v57
    %v234 = vpop.f32.mrb[0].mxu0
    %v235 = vadd.f32 %v96, %v234
    %v236 = vpop.f32.mrb[0].mxu0
    %237 = vmatprep.mubr.f32.mxu0 0.0
    %238 = vmatmul.mubr.f32.gmra.mrb[0].mxu0 %v58
    %v239 = vpop.f32.mrb[0].mxu0
    %v240 = vadd.f32 %v96, %v239
    %v241 = vpop.f32.mrb[0].mxu0
    %242 = vmatprep.mubr.f32.mxu0 0.0
    %243 = vmatmul.mubr.f32.gmra.mrb[0].mxu0 %v59
    %v244 = vpop.f32.mrb[0].mxu0
    %v245 = vadd.f32 %v96, %v244
    %v246 = vpop.f32.mrb[0].mxu0
    %247 = vmatprep.mubr.f32.mxu0 0.0
    %248 = vmatmul.mubr.f32.gmra.mrb[0].mxu0 %v60
    %v249 = vpop.f32.mrb[0].mxu0
    %v250 = vadd.f32 %v96, %v249
    %v251 = vpop.f32.mrb[0].mxu0
    %252 = vmatprep.mubr.f32.mxu0 0.0
    %253 = vmatmul.mubr.f32.gmra.mrb[0].mxu0 %v61
    %v254 = vpop.f32.mrb[0].mxu0
    %v255 = vadd.f32 %v96, %v254
    %v256 = vpop.f32.mrb[0].mxu0
    %257 = vmatprep.mubr.f32.mxu0 0.0
    %258 = vmatmul.mubr.f32.gmra.mrb[0].mxu0 %v62
    %v259 = vpop.f32.mrb[0].mxu0
    %v260 = vadd.f32 %v96, %v259
    %v261 = vpop.f32.mrb[0].mxu0
    %262 = vmatprep.mubr.f32.mxu0 0.0
    %263 = vmatmul.mubr.f32.gmra.mrb[0].mxu0 %v63
    %v264 = vpop.f32.mrb[0].mxu0
    %v265 = vadd.f32 %v96, %v264
    %v266 = vpop.f32.mrb[0].mxu0
    %267 = vmatprep.mubr.f32.mxu0 0.0
    %268 = vmatmul.mubr.f32.gmra.mrb[0].mxu0 %v64
    %v269 = vpop.f32.mrb[0].mxu0
    %v270 = vadd.f32 %v96, %v269
    %v271 = vpop.f32.mrb[0].mxu0
    %272 = vmatprep.mubr.f32.mxu0 0.0
    %273 = vmatmul.mubr.f32.gmra.mrb[0].mxu0 %v65
    %v274 = vpop.f32.mrb[0].mxu0
    %v275 = vadd.f32 %v96, %v274
    %v276 = vpop.f32.mrb[0].mxu0
    %277 = vmatprep.mubr.f32.mxu0 0.0
    %278 = vmatmul.mubr.f32.gmra.mrb[0].mxu0 %v66
    %v279 = vpop.f32.mrb[0].mxu0
    %v280 = vadd.f32 %v96, %v279
    %v281 = vpop.f32.mrb[0].mxu0
    %282 = vmatprep.mubr.f32.mxu0 0.0
    %283 = vmatmul.mubr.f32.gmra.mrb[0].mxu0 %v67
    %v284 = vpop.f32.mrb[0].mxu0
    %v285 = vadd.f32 %v96, %v284
    %v286 = vpop.f32.mrb[0].mxu0
    %287 = vmatprep.mubr.f32.mxu0 0.0
    %288 = vmatmul.mubr.f32.gmra.mrb[0].mxu0 %v68
    %v289 = vpop.f32.mrb[0].mxu0
    %v290 = vadd.f32 %v96, %v289
    %v291 = vpop.f32.mrb[0].mxu0
    %292 = vmatprep.mubr.f32.mxu0 0.0
    %293 = vmatmul.mubr.f32.gmra.mrb[0].mxu0 %v69
    %v294 = vpop.f32.mrb[0].mxu0
    %v295 = vadd.f32 %v96, %v294
    %v296 = vpop.f32.mrb[0].mxu0
    %297 = vmatprep.mubr.f32.mxu0 0.0
    %298 = vmatmul.mubr.f32.gmra.mrb[0].mxu0 %v70
    %v299 = vpop.f32.mrb[0].mxu0
    %v300 = vadd.f32 %v96, %v299
    %v301 = vpop.f32.mrb[0].mxu0
    %302 = vmatprep.mubr.f32.mxu0 0.0
    %303 = vmatmul.mubr.f32.gmra.mrb[0].mxu0 %v71
    %v304 = vpop.f32.mrb[0].mxu0
    %v305 = vadd.f32 %v96, %v304
    %v306 = vpop.f32.mrb[0].mxu0
    %307 = vmatprep.mubr.f32.mxu0 0.0
    %308 = vmatmul.mubr.f32.gmra.mrb[0].mxu0 %v72
    %v309 = vpop.f32.mrb[0].mxu0
    %v310 = vadd.f32 %v96, %v309
    %v311 = vpop.f32.mrb[0].mxu0
    %312 = vmatprep.mubr.f32.mxu0 0.0
    %313 = vmatmul.mubr.f32.gmra.mrb[0].mxu0 %v73
    %v314 = vpop.f32.mrb[0].mxu0
    %v315 = vadd.f32 %v96, %v314
    %v316 = vpop.f32.mrb[0].mxu0
    %317 = vmatprep.mubr.f32.mxu0 0.0
    %318 = vmatmul.mubr.f32.gmra.mrb[0].mxu0 %v74
    %v319 = vpop.f32.mrb[0].mxu0
    %v320 = vadd.f32 %v96, %v319
    %v321 = vpop.f32.mrb[0].mxu0
    %322 = vdwg.mxu0
    %v323 = vmax.f32 %v165, 0.0
    %v324 = vmax.f32 %v170, 0.0
    %v325 = vmax.f32 %v175, 0.0
    %v326 = vmax.f32 %v180, 0.0
    %v327 = vmax.f32 %v185, 0.0
    %v328 = vmax.f32 %v190, 0.0
    %v329 = vmax.f32 %v195, 0.0
    %v330 = vmax.f32 %v200, 0.0
    %v331 = vmax.f32 %v205, 0.0
    %v332 = vmax.f32 %v210, 0.0
    %v333 = vmax.f32 %v215, 0.0
    %v334 = vmax.f32 %v220, 0.0
    %v335 = vmax.f32 %v225, 0.0
    %v336 = vmax.f32 %v230, 0.0
    %v337 = vmax.f32 %v235, 0.0
    %v338 = vmax.f32 %v240, 0.0
    %v339 = vmax.f32 %v245, 0.0
    %v340 = vmax.f32 %v250, 0.0
    %v341 = vmax.f32 %v255, 0.0
    %v342 = vmax.f32 %v260, 0.0
    %v343 = vmax.f32 %v265, 0.0
    %v344 = vmax.f32 %v270, 0.0
    %v345 = vmax.f32 %v275, 0.0
    %v346 = vmax.f32 %v280, 0.0
    %v347 = vmax.f32 %v285, 0.0
    %v348 = vmax.f32 %v290, 0.0
    %v349 = vmax.f32 %v295, 0.0
    %v350 = vmax.f32 %v300, 0.0
    %v351 = vmax.f32 %v305, 0.0
    %v352 = vmax.f32 %v310, 0.0
    %v353 = vmax.f32 %v315, 0.0
    %v354 = vmax.f32 %v320, 0.0
    %v355 = vpack.c.bf16 %v324, %v323
    %v356 = vpack.c.bf16 %v326, %v325
    %v357 = vpack.c.bf16 %v328, %v327
    %v358 = vpack.c.bf16 %v330, %v329
    %v359 = vpack.c.bf16 %v332, %v331
    %v360 = vpack.c.bf16 %v334, %v333
    %v361 = vpack.c.bf16 %v336, %v335
    %v362 = vpack.c.bf16 %v338, %v337
    %v363 = vpack.c.bf16 %v340, %v339
    %v364 = vpack.c.bf16 %v342, %v341
    %v365 = vpack.c.bf16 %v344, %v343
    %v366 = vpack.c.bf16 %v346, %v345
    %v367 = vpack.c.bf16 %v348, %v347
    %v368 = vpack.c.bf16 %v350, %v349
    %v369 = vpack.c.bf16 %v352, %v351
    %v370 = vpack.c.bf16 %v354, %v353
    %v387 = vunpack.c.l.b16 %v355
    %v388 = vunpack.c.h.b16 %v355
    %v389 = vunpack.c.l.b16 %v356
    %v390 = vunpack.c.h.b16 %v356
    %v391 = vunpack.c.l.b16 %v357
    %v392 = vunpack.c.h.b16 %v357
    %v393 = vunpack.c.l.b16 %v358
    %v394 = vunpack.c.h.b16 %v358
    %v395 = vunpack.c.l.b16 %v359
    %v396 = vunpack.c.h.b16 %v359
    %v397 = vunpack.c.l.b16 %v360
    %v398 = vunpack.c.h.b16 %v360
    %v399 = vunpack.c.l.b16 %v361
    %v400 = vunpack.c.h.b16 %v361
    %v401 = vunpack.c.l.b16 %v362
    %v402 = vunpack.c.h.b16 %v362
    %v403 = vunpack.c.l.b16 %v363
    %v404 = vunpack.c.h.b16 %v363
    %v405 = vunpack.c.l.b16 %v364
    %v406 = vunpack.c.h.b16 %v364
    %v407 = vunpack.c.l.b16 %v365
    %v408 = vunpack.c.h.b16 %v365
    %v409 = vunpack.c.l.b16 %v366
    %v410 = vunpack.c.h.b16 %v366
    %v411 = vunpack.c.l.b16 %v367
    %v412 = vunpack.c.h.b16 %v367
    %v413 = vunpack.c.l.b16 %v368
    %v414 = vunpack.c.h.b16 %v368
    %v415 = vunpack.c.l.b16 %v369
    %v416 = vunpack.c.h.b16 %v369
    %v417 = vunpack.c.l.b16 %v370
    %v418 = vunpack.c.h.b16 %v370
    %v419 = vpack.c.b16 %v387, %v387
    %v420 = vpack.c.b16 %v388, %v388
    %v421 = vpack.c.b16 %v389, %v389
    %v422 = vpack.c.b16 %v390, %v390
    %v423 = vpack.c.b16 %v391, %v391
    %v424 = vpack.c.b16 %v392, %v392
    %v425 = vpack.c.b16 %v393, %v393
    %v426 = vpack.c.b16 %v394, %v394
    %v427 = vpack.c.b16 %v395, %v395
    %v428 = vpack.c.b16 %v396, %v396
    %v429 = vpack.c.b16 %v397, %v397
    %v430 = vpack.c.b16 %v398, %v398
    %v431 = vpack.c.b16 %v399, %v399
    %v432 = vpack.c.b16 %v400, %v400
    %v433 = vpack.c.b16 %v401, %v401
    %v434 = vpack.c.b16 %v402, %v402
    %v435 = vpack.c.b16 %v403, %v403
    %v436 = vpack.c.b16 %v404, %v404
    %v437 = vpack.c.b16 %v405, %v405
    %v438 = vpack.c.b16 %v406, %v406
    %v439 = vpack.c.b16 %v407, %v407
    %v440 = vpack.c.b16 %v408, %v408
    %v441 = vpack.c.b16 %v409, %v409
    %v442 = vpack.c.b16 %v410, %v410
    %v443 = vpack.c.b16 %v411, %v411
    %v444 = vpack.c.b16 %v412, %v412
    %v445 = vpack.c.b16 %v413, %v413
    %v446 = vpack.c.b16 %v414, %v414
    %v447 = vpack.c.b16 %v415, %v415
    %v448 = vpack.c.b16 %v416, %v416
    %v449 = vpack.c.b16 %v417, %v417
    %v450 = vpack.c.b16 %v418, %v418
    %483 = vst [vmem:[#allocation7] sm:$0xf] %v419
    %484 = vst [vmem:[#allocation7 + $0x4] sm:$0xf] %v420
    %485 = vst [vmem:[#allocation7 + $0x8] sm:$0xf] %v421
    %486 = vst [vmem:[#allocation7 + $0xc] sm:$0xf] %v422
    %487 = vst [vmem:[#allocation7 + $0x10] sm:$0xf] %v423
    %488 = vst [vmem:[#allocation7 + $0x14] sm:$0xf] %v424
    %489 = vst [vmem:[#allocation7 + $0x18] sm:$0xf] %v425
    %490 = vst [vmem:[#allocation7 + $0x1c] sm:$0xf] %v426
    %491 = vst [vmem:[#allocation7 + $0x20] sm:$0xf] %v427
    %492 = vst [vmem:[#allocation7 + $0x24] sm:$0xf] %v428
    %493 = vst [vmem:[#allocation7 + $0x28] sm:$0xf] %v429
    %494 = vst [vmem:[#allocation7 + $0x2c] sm:$0xf] %v430
    %495 = vst [vmem:[#allocation7 + $0x30] sm:$0xf] %v431
    %496 = vst [vmem:[#allocation7 + $0x34] sm:$0xf] %v432
    %497 = vst [vmem:[#allocation7 + $0x38] sm:$0xf] %v433
    %498 = vst [vmem:[#allocation7 + $0x3c] sm:$0xf] %v434
    %499 = vst [vmem:[#allocation7 + $0x40] sm:$0xf] %v435
    %500 = vst [vmem:[#allocation7 + $0x44] sm:$0xf] %v436
    %501 = vst [vmem:[#allocation7 + $0x48] sm:$0xf] %v437
    %502 = vst [vmem:[#allocation7 + $0x4c] sm:$0xf] %v438
    %503 = vst [vmem:[#allocation7 + $0x50] sm:$0xf] %v439
    %504 = vst [vmem:[#allocation7 + $0x54] sm:$0xf] %v440
    %505 = vst [vmem:[#allocation7 + $0x58] sm:$0xf] %v441
    %506 = vst [vmem:[#allocation7 + $0x5c] sm:$0xf] %v442
    %507 = vst [vmem:[#allocation7 + $0x60] sm:$0xf] %v443
    %508 = vst [vmem:[#allocation7 + $0x64] sm:$0xf] %v444
    %509 = vst [vmem:[#allocation7 + $0x68] sm:$0xf] %v445
    %510 = vst [vmem:[#allocation7 + $0x6c] sm:$0xf] %v446
    %511 = vst [vmem:[#allocation7 + $0x70] sm:$0xf] %v447
    %512 = vst [vmem:[#allocation7 + $0x74] sm:$0xf] %v448
    %513 = vst [vmem:[#allocation7 + $0x78] sm:$0xf] %v449
    %514 = vst [vmem:[#allocation7 + $0x7c] sm:$0xf] %v450
    // Predicated region
    $region22: #{tpu_custom_call.1} parent=1 // pred_check
      _
    $region23: #{tpu_custom_call.1} parent=1 // pred_check_branch
      %516 = sbr.rel (0) target = $region25
    $region24: #{tpu_custom_call.1} parent=1 // pred_region
      %s518 = ssub.s32 2048, 2048
      %519 = vsyncadd [#allocation4], %s518
      %s520 = sshll.u32 [#allocation7], 4
      %s521 = int_to_ptr.vmem [resolvable:$true] %s520
      %526 = dma.vmem_to_hbm [thread:$0]  %s521, 2048, %s3, [#allocation4], 64, 64, 4
    $region25: #{tpu_custom_call.1} parent=1 // pred_fallthru
      _
    // Predicated region
    $region26: #{tpu_custom_call.1} parent=1 // pred_check
      _
    $region27: #{tpu_custom_call.1} parent=1 // pred_check_branch
      %528 = sbr.rel (0) target = $region29
    $region28: #{tpu_custom_call.1} parent=1 // pred_region
      %529 = dma.done [#allocation4], 2048
    $region29: #{tpu_custom_call.1} parent=1 // pred_fallthru
      _
    %530 = vsyncpa [#allocation3], 1
    %531 = vsyncpa [#allocation6], 1
    %532 = vsyncpa [#allocation4], 1

</llo_original>
